<compile_context>
chip_gen: v7x
topology: tpu7x:2x2x1
jax: 0.10.0
libtpu: 0.0.40
codegen_flags: <defaults>
</compile_context>

<pallas_src>
import jax
import jax.numpy as jnp
from jax.experimental import pallas as pl
from jax.experimental.pallas import tpu as pltpu

_LANE = 128      # f32 vreg lane width  -> feature padding target
_SUBLANE = 8     # f32 vreg sublane cnt -> batch padding target


def _round_up(n, m):
    return ((n + m - 1) // m) * m


def _pack_params(weight, bias, d_pad):
    """Split + transpose + zero-pad the PyTorch (D, 2D) Linear weight once.

    Returns:
      wx: (d_pad, d_pad)  = pad(W[:, :D].T)   (acts on x)
      wh: (d_pad, d_pad)  = pad(W[:, D:].T)   (acts on h_prev)
      b:  (1, d_pad)      = pad(bias)
    """
    D = weight.shape[0]
    wx = jnp.zeros((d_pad, d_pad), jnp.float32).at[:D, :D].set(weight[:, :D].T)
    wh = jnp.zeros((d_pad, d_pad), jnp.float32).at[:D, :D].set(weight[:, D:].T)
    b = jnp.zeros((1, d_pad), jnp.float32).at[0, :D].set(bias)
    return wx, wh, b


# ----------------------------------------------------------------------------
# Kernel 1: single RNN-cell step (the module's forward), grid=() — no grid loop.
# ----------------------------------------------------------------------------
def _rnn_cell_kernel(x_ref, h_ref, wx_ref, wh_ref, b_ref, out_ref):
    # x_ref, h_ref: (Bp, Dp)   wx_ref, wh_ref: (Dp, Dp)   b_ref: (1, Dp)
    acc = jnp.dot(x_ref[...], wx_ref[...], preferred_element_type=jnp.float32)
    acc = acc + jnp.dot(h_ref[...], wh_ref[...],
                        preferred_element_type=jnp.float32)
    out_ref[...] = jnp.tanh(acc + b_ref[...]).astype(out_ref.dtype)


def recurrent_unit(x, h_prev, weight, bias):
    """One RNN cell step: tanh(Linear(concat([x, h_prev], 1))).

    x, h_prev: (B, D) f32; weight: (D, 2D) PyTorch (out, in); bias: (D,).
    """
    B, D = x.shape
    Bp = _round_up(B, _SUBLANE)
    Dp = _round_up(D, _LANE)

    wx, wh, b = _pack_params(weight, bias, Dp)
    xp = jnp.zeros((Bp, Dp), jnp.float32).at[:B, :D].set(x)
    hp = jnp.zeros((Bp, Dp), jnp.float32).at[:B, :D].set(h_prev)

    out = pl.pallas_call(
        _rnn_cell_kernel,
        out_shape=jax.ShapeDtypeStruct((Bp, Dp), jnp.float32),
        in_specs=[pl.BlockSpec(memory_space=pltpu.MemorySpace.VMEM)] * 5,
        out_specs=pl.BlockSpec(memory_space=pltpu.MemorySpace.VMEM),
    )(xp, hp, wx, wh, b)
    return out[:B, :D]


# ----------------------------------------------------------------------------
# Kernel 2: fused recurrent loop — one pallas_call for all T steps.
# Weights/bias/h0 resident in VMEM (constant index_map); h carried in scratch.
# ----------------------------------------------------------------------------
def _rnn_seq_kernel(x_ref, h0_ref, wx_ref, wh_ref, b_ref, hs_ref, h_scr):
    # x_ref: (1, Bp, Dp)  h0_ref: (Bp, Dp)  wx/wh: (Dp, Dp)  b: (1, Dp)
    # hs_ref: (1, Bp, Dp) output slab for this step  h_scr: (Bp, Dp) carry
    t = pl.program_id(0)

    @pl.when(t == 0)
    def _():
        h_scr[...] = h0_ref[...].astype(jnp.float32)

    acc = jnp.dot(x_ref[0], wx_ref[...], preferred_element_type=jnp.float32)
    acc = acc + jnp.dot(h_scr[...], wh_ref[...],
                        preferred_element_type=jnp.float32)
    h_new = jnp.tanh(acc + b_ref[...])
    h_scr[...] = h_new
    hs_ref[0] = h_new.astype(hs_ref.dtype)


def recurrent_unit_sequence(xs, h0, weight, bias):
    """Apply the RecurrentUnit over a whole sequence in one pallas_call.

    xs: (T, B, D), h0: (B, D).  Returns all hidden states hs: (T, B, D).
    Equivalent to looping the PyTorch module over t (h_t = cell(x_t, h_{t-1})).
    """
    T, B, D = xs.shape
    Bp = _round_up(B, _SUBLANE)
    Dp = _round_up(D, _LANE)

    wx, wh, b = _pack_params(weight, bias, Dp)
    xsp = jnp.zeros((T, Bp, Dp), jnp.float32).at[:, :B, :D].set(xs)
    h0p = jnp.zeros((Bp, Dp), jnp.float32).at[:B, :D].set(h0)

    hs = pl.pallas_call(
        _rnn_seq_kernel,
        out_shape=jax.ShapeDtypeStruct((T, Bp, Dp), jnp.float32),
        grid_spec=pltpu.PrefetchScalarGridSpec(
            num_scalar_prefetch=0,
            grid=(T,),  # sequential recurrence -> "arbitrary"
            in_specs=[
                pl.BlockSpec((1, Bp, Dp), lambda t: (t, 0, 0)),  # x_t streamed
                pl.BlockSpec((Bp, Dp), lambda t: (0, 0)),        # h0 resident
                pl.BlockSpec((Dp, Dp), lambda t: (0, 0)),        # W_x resident
                pl.BlockSpec((Dp, Dp), lambda t: (0, 0)),        # W_h resident
                pl.BlockSpec((1, Dp), lambda t: (0, 0)),         # bias resident
            ],
            out_specs=pl.BlockSpec((1, Bp, Dp), lambda t: (t, 0, 0)),
            scratch_shapes=[pltpu.VMEM((Bp, Dp), jnp.float32)],  # h carry
        ),
        compiler_params=pltpu.CompilerParams(
            dimension_semantics=("arbitrary",)),
    )(xsp, h0p, wx, wh, b)
    return hs[:, :B, :D]


# ----------------------------------------------------------------------------
# Pure-JAX references (full-precision matmul to match the f32 MXU path).
# ----------------------------------------------------------------------------
def recurrent_unit_ref(x, h_prev, weight, bias):
    xh = jnp.concatenate([x, h_prev], axis=1)
    y = jnp.dot(xh, weight.T, precision=jax.lax.Precision.HIGHEST)
    return jnp.tanh(y + bias)


def recurrent_unit_sequence_ref(xs, h0, weight, bias):
    def step(h, x):
        h = recurrent_unit_ref(x, h, weight, bias)
        return h, h
    _, hs = jax.lax.scan(step, h0, xs)
    return hs


if __name__ == "__main__":
    B = 2    # batch
    D = 32   # d_model
    T = 8    # sequence length for the fused-loop kernel

    key = jax.random.PRNGKey(0)
    kx, kh, kw, kb, ks = jax.random.split(key, 5)

    x = jax.random.normal(kx, (B, D), dtype=jnp.float32)
    h_prev = jax.random.normal(kh, (B, D), dtype=jnp.float32)

    # nn.Linear-style init: U(-1/sqrt(fan_in), 1/sqrt(fan_in)), fan_in = 2*D.
    bound = 1.0 / (2.0 * D) ** 0.5
    weight = jax.random.uniform(kw, (D, 2 * D), jnp.float32, -bound, bound)
    bias = jax.random.uniform(kb, (D,), jnp.float32, -bound, bound)

    # --- single step (the module's forward) ------------------------------
    h = jax.block_until_ready(recurrent_unit(x, h_prev, weight, bias))
    h_ref = recurrent_unit_ref(x, h_prev, weight, bias)
    assert h.shape == (B, D)
    assert jnp.allclose(h, h_ref, atol=1e-5, rtol=1e-5), "step mismatch"

    # --- fused T-step recurrence (one pallas_call) ------------------------
    xs = jax.random.normal(ks, (T, B, D), dtype=jnp.float32)
    hs = jax.block_until_ready(
        recurrent_unit_sequence(xs, h_prev, weight, bias))
    hs_ref = recurrent_unit_sequence_ref(xs, h_prev, weight, bias)
    assert hs.shape == (T, B, D)
    assert jnp.allclose(hs, hs_ref, atol=1e-4, rtol=1e-4), "sequence mismatch"

    print("KERNEL_OK")
</pallas_src>

<mosaic_0001>
module attributes {stable_mosaic.version = 11 : i64} {
  func.func @_rnn_cell_kernel(%arg0: memref<8x128xf32, #tpu.memory_space<vmem>>, %arg1: memref<8x128xf32, #tpu.memory_space<vmem>>, %arg2: memref<128x128xf32, #tpu.memory_space<vmem>>, %arg3: memref<128x128xf32, #tpu.memory_space<vmem>>, %arg4: memref<1x128xf32, #tpu.memory_space<vmem>>, %arg5: memref<8x128xf32, #tpu.memory_space<vmem>>) attributes {dimension_semantics = [], scalar_prefetch = 0 : i64, scratch_operands = 0 : i64, tpu.core_type = #tpu.core_type<tc>} {
    %c0 = arith.constant 0 : index
    %c0_0 = arith.constant 0 : index
    %0 = vector.load %arg0[%c0, %c0_0] : memref<8x128xf32, #tpu.memory_space<vmem>>, vector<8x128xf32>
    %c0_1 = arith.constant 0 : index
    %c0_2 = arith.constant 0 : index
    %1 = vector.load %arg2[%c0_1, %c0_2] : memref<128x128xf32, #tpu.memory_space<vmem>>, vector<128x128xf32>
    %cst = arith.constant dense<0.000000e+00> : vector<8x128xf32>
    %2 = tpu.matmul %0, %1, %cst {dimension_numbers = #tpu.dot_dimension_numbers<[1], [0], [0], [1], [0, 0, 1, 1], [], []>} : vector<8x128xf32>, vector<128x128xf32>, vector<8x128xf32> -> vector<8x128xf32>
    %c0_3 = arith.constant 0 : index
    %c0_4 = arith.constant 0 : index
    %3 = vector.load %arg1[%c0_3, %c0_4] : memref<8x128xf32, #tpu.memory_space<vmem>>, vector<8x128xf32>
    %c0_5 = arith.constant 0 : index
    %c0_6 = arith.constant 0 : index
    %4 = vector.load %arg3[%c0_5, %c0_6] : memref<128x128xf32, #tpu.memory_space<vmem>>, vector<128x128xf32>
    %cst_7 = arith.constant dense<0.000000e+00> : vector<8x128xf32>
    %5 = tpu.matmul %3, %4, %cst_7 {dimension_numbers = #tpu.dot_dimension_numbers<[1], [0], [0], [1], [0, 0, 1, 1], [], []>} : vector<8x128xf32>, vector<128x128xf32>, vector<8x128xf32> -> vector<8x128xf32>
    %6 = arith.addf %2, %5 : vector<8x128xf32>
    %c0_8 = arith.constant 0 : index
    %c0_9 = arith.constant 0 : index
    %7 = vector.load %arg4[%c0_8, %c0_9] : memref<1x128xf32, #tpu.memory_space<vmem>>, vector<1x128xf32>
    %8 = vector.broadcast %7 : vector<1x128xf32> to vector<8x128xf32>
    %9 = arith.addf %6, %8 : vector<8x128xf32>
    %10 = math.tanh %9 : vector<8x128xf32>
    %c0_10 = arith.constant 0 : index
    %c0_11 = arith.constant 0 : index
    %11 = vector.load %arg5[%c0_10, %c0_11] : memref<8x128xf32, #tpu.memory_space<vmem>>, vector<8x128xf32>
    tpu.vector_store %arg5[%c0_10, %c0_11], %10 {strides = array<i32>} : memref<8x128xf32, #tpu.memory_space<vmem>>, vector<8x128xf32>,
    return
  }
}

</mosaic_0001>

<llo_original>
// kernel: tpu_custom_call.1
$region0: #{tpu_custom_call.1}
  #allocation0 [shape = 'u32[]', space=smem, size = 0x4, offset = 0x4, fixed_abs, tag = 'smem constant byte address 0x4 - core index']
  #allocation1 [shape = 'u32[144,128]{1,0:T(1,128)}', space=vmem, size = 0x12000, scoped, tag = 'internal scratch']
  %s0 = inlined_call_operand.hbm [shape: f32[8,128], index: 0, kind: input, shape index: {}]
  %s1 = inlined_call_operand.hbm [shape: f32[8,128], index: 1, kind: input, shape index: {}]
  %s2 = inlined_call_operand.hbm [shape: f32[128,128], index: 2, kind: input, shape index: {}]
  %s3 = inlined_call_operand.hbm [shape: f32[128,128], index: 3, kind: input, shape index: {}]
  %s4 = inlined_call_operand.vmem [shape: f32[1,128], index: 4, kind: input, shape index: {}]
  %s5 = inlined_call_operand.hbm [shape: f32[8,128], index: 5, kind: output, shape index: {}]
  %s6 = sld [smem:[#allocation0]]
  $region46: #{tpu_custom_call.1} parent=0
    _
  %s8 = ssub.s32 1, %s6
  %s9 = scalar_select 0, %s8, %s6
  $region1: #{tpu_custom_call.1} parent=0
    #allocation2 [shape = 'u8[4096]{0}', space=vmem, size = 0x1000, scoped, tag = 'input window, operand 0, single buffered']
    #allocation3 [shape = 's32[1]{0}', space=sflag, size = 0x4, scoped, tag = 'scoped memory for tpu_custom_call.1']
    #allocation4 [shape = 's32[1]{0}', space=sflag, size = 0x4, scoped, tag = 'scoped memory for tpu_custom_call.1']
    #allocation5 [shape = 'u8[4096]{0}', space=vmem, size = 0x1000, scoped, tag = 'input window, operand 1, single buffered']
    #allocation6 [shape = 's32[1]{0}', space=sflag, size = 0x4, scoped, tag = 'scoped memory for tpu_custom_call.1']
    #allocation7 [shape = 'u8[65536]{0}', space=vmem, size = 0x10000, scoped, tag = 'input window, operand 2, single buffered']
    #allocation8 [shape = 'u8[65536]{0}', space=vmem, size = 0x10000, scoped, tag = 'input window, operand 3, single buffered']
    #allocation9 [shape = 's32[1]{0}', space=sflag, size = 0x4, scoped, tag = 'scoped memory for tpu_custom_call.1']
    #allocation10 [shape = 'u8[4096]{0}', space=vmem, size = 0x1000, scoped, tag = 'output window, operand 0, single buffered']
    %10 = vsyncpa [#allocation3], 0
    %11 = vsyncpa [#allocation6], 0
    %12 = vsyncpa [#allocation9], 0
    %13 = vsyncpa [#allocation4], 0
    // Predicated region
    $region2: #{tpu_custom_call.1} parent=1 // pred_check
      _
    $region3: #{tpu_custom_call.1} parent=1 // pred_check_branch
      %15 = sbr.rel (0) target = $region5
    $region4: #{tpu_custom_call.1} parent=1 // pred_region
      %s17 = ssub.s32 128, 128
      %18 = vsyncadd [#allocation3], %s17
      %s20 = sshll.u32 [#allocation2], 4
      %s21 = int_to_ptr.vmem [resolvable:$true] %s20
      %23 = dma.hbm_to_vmem [thread:$0]  %s0, 128, %s21, [#allocation3]
    $region5: #{tpu_custom_call.1} parent=1 // pred_fallthru
      _
    // Predicated region
    $region6: #{tpu_custom_call.1} parent=1 // pred_check
      _
    $region7: #{tpu_custom_call.1} parent=1 // pred_check_branch
      %25 = sbr.rel (0) target = $region9
    $region8: #{tpu_custom_call.1} parent=1 // pred_region
      %s27 = ssub.s32 128, 128
      %28 = vsyncadd [#allocation6], %s27
      %s30 = sshll.u32 [#allocation5], 4
      %s31 = int_to_ptr.vmem [resolvable:$true] %s30
      %33 = dma.hbm_to_vmem [thread:$0]  %s1, 128, %s31, [#allocation6]
    $region9: #{tpu_custom_call.1} parent=1 // pred_fallthru
      _
    // Predicated region
    $region10: #{tpu_custom_call.1} parent=1 // pred_check
      _
    $region11: #{tpu_custom_call.1} parent=1 // pred_check_branch
      %35 = sbr.rel (0) target = $region13
    $region12: #{tpu_custom_call.1} parent=1 // pred_region
      %s37 = ssub.s32 2048, 2048
      %38 = vsyncadd [#allocation6], %s37
      %s39 = sshll.u32 [#allocation7], 4
      %s40 = int_to_ptr.vmem [resolvable:$true] %s39
      %45 = dma.hbm_to_vmem [thread:$0]  %s2, 2048, %s40, [#allocation6], 128, 128, 8
    $region13: #{tpu_custom_call.1} parent=1 // pred_fallthru
      _
    // Predicated region
    $region14: #{tpu_custom_call.1} parent=1 // pred_check
      _
    $region15: #{tpu_custom_call.1} parent=1 // pred_check_branch
      %47 = sbr.rel (0) target = $region17
    $region16: #{tpu_custom_call.1} parent=1 // pred_region
      %s49 = ssub.s32 2048, 2048
      %50 = vsyncadd [#allocation9], %s49
      %s51 = sshll.u32 [#allocation8], 4
      %s52 = int_to_ptr.vmem [resolvable:$true] %s51
      %57 = dma.hbm_to_vmem [thread:$0]  %s3, 2048, %s52, [#allocation9], 128, 128, 8
    $region17: #{tpu_custom_call.1} parent=1 // pred_fallthru
      _
    // Predicated region
    $region18: #{tpu_custom_call.1} parent=1 // pred_check
      _
    $region19: #{tpu_custom_call.1} parent=1 // pred_check_branch
      %59 = sbr.rel (0) target = $region21
    $region20: #{tpu_custom_call.1} parent=1 // pred_region
      _
    $region21: #{tpu_custom_call.1} parent=1 // pred_fallthru
      _
    // Predicated region
    $region22: #{tpu_custom_call.1} parent=1 // pred_check
      _
    $region23: #{tpu_custom_call.1} parent=1 // pred_check_branch
      %61 = sbr.rel (0) target = $region25
    $region24: #{tpu_custom_call.1} parent=1 // pred_region
      %62 = dma.done [#allocation3], 128
    $region25: #{tpu_custom_call.1} parent=1 // pred_fallthru
      _
    // Predicated region
    $region26: #{tpu_custom_call.1} parent=1 // pred_check
      _
    $region27: #{tpu_custom_call.1} parent=1 // pred_check_branch
      %64 = sbr.rel (0) target = $region29
    $region28: #{tpu_custom_call.1} parent=1 // pred_region
      %65 = dma.done [#allocation6], 128
    $region29: #{tpu_custom_call.1} parent=1 // pred_fallthru
      _
    // Predicated region
    $region30: #{tpu_custom_call.1} parent=1 // pred_check
      _
    $region31: #{tpu_custom_call.1} parent=1 // pred_check_branch
      %67 = sbr.rel (0) target = $region33
    $region32: #{tpu_custom_call.1} parent=1 // pred_region
      %68 = dma.done [#allocation6], 2048
    $region33: #{tpu_custom_call.1} parent=1 // pred_fallthru
      _
    // Predicated region
    $region34: #{tpu_custom_call.1} parent=1 // pred_check
      _
    $region35: #{tpu_custom_call.1} parent=1 // pred_check_branch
      %70 = sbr.rel (0) target = $region37
    $region36: #{tpu_custom_call.1} parent=1 // pred_region
      %71 = dma.done [#allocation9], 2048
    $region37: #{tpu_custom_call.1} parent=1 // pred_fallthru
      _
    %v72 = vld [vmem:[#allocation2] sm:$0xff]
    %v73 = vld [vmem:[#allocation7] sm:$0xff]
    %v74 = vld [vmem:[#allocation7 + $0x8] sm:$0xff]
    %v75 = vld [vmem:[#allocation7 + $0x10] sm:$0xff]
    %v76 = vld [vmem:[#allocation7 + $0x18] sm:$0xff]
    %v77 = vld [vmem:[#allocation7 + $0x20] sm:$0xff]
    %v78 = vld [vmem:[#allocation7 + $0x28] sm:$0xff]
    %v79 = vld [vmem:[#allocation7 + $0x30] sm:$0xff]
    %v80 = vld [vmem:[#allocation7 + $0x38] sm:$0xff]
    %v81 = vld [vmem:[#allocation7 + $0x40] sm:$0xff]
    %v82 = vld [vmem:[#allocation7 + $0x48] sm:$0xff]
    %v83 = vld [vmem:[#allocation7 + $0x50] sm:$0xff]
    %v84 = vld [vmem:[#allocation7 + $0x58] sm:$0xff]
    %v85 = vld [vmem:[#allocation7 + $0x60] sm:$0xff]
    %v86 = vld [vmem:[#allocation7 + $0x68] sm:$0xff]
    %v87 = vld [vmem:[#allocation7 + $0x70] sm:$0xff]
    %v88 = vld [vmem:[#allocation7 + $0x78] sm:$0xff]
    %v89 = vld [vmem:[#allocation5] sm:$0xff]
    %v90 = vld [vmem:[#allocation8] sm:$0xff]
    %v91 = vld [vmem:[#allocation8 + $0x8] sm:$0xff]
    %v92 = vld [vmem:[#allocation8 + $0x10] sm:$0xff]
    %v93 = vld [vmem:[#allocation8 + $0x18] sm:$0xff]
    %v94 = vld [vmem:[#allocation8 + $0x20] sm:$0xff]
    %v95 = vld [vmem:[#allocation8 + $0x28] sm:$0xff]
    %v96 = vld [vmem:[#allocation8 + $0x30] sm:$0xff]
    %v97 = vld [vmem:[#allocation8 + $0x38] sm:$0xff]
    %v98 = vld [vmem:[#allocation8 + $0x40] sm:$0xff]
    %v99 = vld [vmem:[#allocation8 + $0x48] sm:$0xff]
    %v100 = vld [vmem:[#allocation8 + $0x50] sm:$0xff]
    %v101 = vld [vmem:[#allocation8 + $0x58] sm:$0xff]
    %v102 = vld [vmem:[#allocation8 + $0x60] sm:$0xff]
    %v103 = vld [vmem:[#allocation8 + $0x68] sm:$0xff]
    %v104 = vld [vmem:[#allocation8 + $0x70] sm:$0xff]
    %v105 = vld [vmem:[#allocation8 + $0x78] sm:$0xff]
    %106 = vmatprep.subr.mxu0 0.0
    %107 = vmatpush1.msra.mxu0 %v90
    %108 = vmatprep.subr.mxu0 0.0
    %109 = vmatpush1.msra.mxu0 %v91
    %110 = vmatprep.subr.mxu0 0.0
    %111 = vmatpush1.msra.mxu0 %v92
    %112 = vmatprep.subr.mxu0 0.0
    %113 = vmatpush1.msra.mxu0 %v93
    %114 = vmatprep.subr.mxu0 0.0
    %115 = vmatpush1.msra.mxu0 %v94
    %116 = vmatprep.subr.mxu0 0.0
    %117 = vmatpush1.msra.mxu0 %v95
    %118 = vmatprep.subr.mxu0 0.0
    %119 = vmatpush1.msra.mxu0 %v96
    %120 = vmatprep.subr.mxu0 0.0
    %121 = vmatpush1.msra.mxu0 %v97
    %122 = vmatprep.subr.mxu0 0.0
    %123 = vmatpush1.msra.mxu0 %v98
    %124 = vmatprep.subr.mxu0 0.0
    %125 = vmatpush1.msra.mxu0 %v99
    %126 = vmatprep.subr.mxu0 0.0
    %127 = vmatpush1.msra.mxu0 %v100
    %128 = vmatprep.subr.mxu0 0.0
    %129 = vmatpush1.msra.mxu0 %v101
    %130 = vmatprep.subr.mxu0 0.0
    %131 = vmatpush1.msra.mxu0 %v102
    %132 = vmatprep.subr.mxu0 0.0
    %133 = vmatpush1.msra.mxu0 %v103
    %134 = vmatprep.subr.mxu0 0.0
    %135 = vmatpush1.msra.mxu0 %v104
    %136 = vmatprep.subr.mxu0 0.0
    %137 = vmatpush1.msra.mxu0 %v105
    %138 = vmatprep.subr.mxu0 0.0
    %139 = vmatpush1.msra.mxu0 0.0
    %140 = vmatprep.subr.mxu0 0.0
    %141 = vmatpush1.msra.mxu0 0.0
    %142 = vmatprep.subr.mxu0 0.0
    %143 = vmatpush1.msra.mxu0 0.0
    %144 = vmatprep.subr.mxu0 0.0
    %145 = vmatpush1.msra.mxu0 0.0
    %146 = vmatprep.subr.mxu0 0.0
    %147 = vmatpush1.msra.mxu0 0.0
    %148 = vmatprep.subr.mxu0 0.0
    %149 = vmatpush1.msra.mxu0 0.0
    %150 = vmatprep.subr.mxu0 0.0
    %151 = vmatpush1.msra.mxu0 0.0
    %152 = vmatprep.subr.mxu0 0.0
    %153 = vmatpush1.msra.mxu0 0.0
    %154 = vmatprep.subr.mxu0 0.0
    %155 = vmatpush1.msra.mxu0 0.0
    %156 = vmatprep.subr.mxu0 0.0
    %157 = vmatpush1.msra.mxu0 0.0
    %158 = vmatprep.subr.mxu0 0.0
    %159 = vmatpush1.msra.mxu0 0.0
    %160 = vmatprep.subr.mxu0 0.0
    %161 = vmatpush1.msra.mxu0 0.0
    %162 = vmatprep.subr.mxu0 0.0
    %163 = vmatpush1.msra.mxu0 0.0
    %164 = vmatprep.subr.mxu0 0.0
    %165 = vmatpush1.msra.mxu0 0.0
    %166 = vmatprep.subr.mxu0 0.0
    %167 = vmatpush1.msra.mxu0 0.0
    %168 = vmatprep.subr.mxu0 0.0
    %169 = vmatpush1.msra.mxu0 0.0
    %170 = vmatprep.mubr.f32.mxu0 0.0
    %171 = vmatmul.mubr.f32.gmra.mrb[0].mxu0 %v89
    %v172 = vpop.f32.mrb[0].mxu0
    %v173 = vadd.f32 0.0, %v172
    %v174 = vpop.f32.mrb[0].mxu0
    %175 = vdwg.mxu0
    %176 = vmatprep.subr.mxu0 0.0
    %177 = vmatpush1.msra.mxu0 %v73
    %178 = vmatprep.subr.mxu0 0.0
    %179 = vmatpush1.msra.mxu0 %v74
    %180 = vmatprep.subr.mxu0 0.0
    %181 = vmatpush1.msra.mxu0 %v75
    %182 = vmatprep.subr.mxu0 0.0
    %183 = vmatpush1.msra.mxu0 %v76
    %184 = vmatprep.subr.mxu0 0.0
    %185 = vmatpush1.msra.mxu0 %v77
    %186 = vmatprep.subr.mxu0 0.0
    %187 = vmatpush1.msra.mxu0 %v78
    %188 = vmatprep.subr.mxu0 0.0
    %189 = vmatpush1.msra.mxu0 %v79
    %190 = vmatprep.subr.mxu0 0.0
    %191 = vmatpush1.msra.mxu0 %v80
    %192 = vmatprep.subr.mxu0 0.0
    %193 = vmatpush1.msra.mxu0 %v81
    %194 = vmatprep.subr.mxu0 0.0
    %195 = vmatpush1.msra.mxu0 %v82
    %196 = vmatprep.subr.mxu0 0.0
    %197 = vmatpush1.msra.mxu0 %v83
    %198 = vmatprep.subr.mxu0 0.0
    %199 = vmatpush1.msra.mxu0 %v84
    %200 = vmatprep.subr.mxu0 0.0
    %201 = vmatpush1.msra.mxu0 %v85
    %202 = vmatprep.subr.mxu0 0.0
    %203 = vmatpush1.msra.mxu0 %v86
    %204 = vmatprep.subr.mxu0 0.0
    %205 = vmatpush1.msra.mxu0 %v87
    %206 = vmatprep.subr.mxu0 0.0
    %207 = vmatpush1.msra.mxu0 %v88
    %208 = vmatprep.subr.mxu0 0.0
    %209 = vmatpush1.msra.mxu0 0.0
    %210 = vmatprep.subr.mxu0 0.0
    %211 = vmatpush1.msra.mxu0 0.0
    %212 = vmatprep.subr.mxu0 0.0
    %213 = vmatpush1.msra.mxu0 0.0
    %214 = vmatprep.subr.mxu0 0.0
    %215 = vmatpush1.msra.mxu0 0.0
    %216 = vmatprep.subr.mxu0 0.0
    %217 = vmatpush1.msra.mxu0 0.0
    %218 = vmatprep.subr.mxu0 0.0
    %219 = vmatpush1.msra.mxu0 0.0
    %220 = vmatprep.subr.mxu0 0.0
    %221 = vmatpush1.msra.mxu0 0.0
    %222 = vmatprep.subr.mxu0 0.0
    %223 = vmatpush1.msra.mxu0 0.0
    %224 = vmatprep.subr.mxu0 0.0
    %225 = vmatpush1.msra.mxu0 0.0
    %226 = vmatprep.subr.mxu0 0.0
    %227 = vmatpush1.msra.mxu0 0.0
    %228 = vmatprep.subr.mxu0 0.0
    %229 = vmatpush1.msra.mxu0 0.0
    %230 = vmatprep.subr.mxu0 0.0
    %231 = vmatpush1.msra.mxu0 0.0
    %232 = vmatprep.subr.mxu0 0.0
    %233 = vmatpush1.msra.mxu0 0.0
    %234 = vmatprep.subr.mxu0 0.0
    %235 = vmatpush1.msra.mxu0 0.0
    %236 = vmatprep.subr.mxu0 0.0
    %237 = vmatpush1.msra.mxu0 0.0
    %238 = vmatprep.subr.mxu0 0.0
    %239 = vmatpush1.msra.mxu0 0.0
    %240 = vmatprep.mubr.f32.mxu0 0.0
    %241 = vmatmul.mubr.f32.gmra.mrb[0].mxu0 %v72
    %v242 = vpop.f32.mrb[0].mxu0
    %v243 = vadd.f32 %v173, %v242
    %v244 = vpop.f32.mrb[0].mxu0
    %245 = vdwg.mxu0
    %v246 = vld [vmem:[%s4] sm:$0x1]
    %v248 = vlaneseq
    %v249 = vshrl.u32 %v248, 7
    %v250 = vsub.s32 0, %v249
    %v251 = vrot.slane %v246, %v250
    %v253 = vadd.f32 %v243, %v251
    %v254 = vtanh.pop %v253
    %255 = vst [vmem:[#allocation10] sm:$0xff] %v254
    // Predicated region
    $region38: #{tpu_custom_call.1} parent=1 // pred_check
      _
    $region39: #{tpu_custom_call.1} parent=1 // pred_check_branch
      %257 = sbr.rel (0) target = $region41
    $region40: #{tpu_custom_call.1} parent=1 // pred_region
      %s259 = ssub.s32 128, 128
      %260 = vsyncadd [#allocation4], %s259
      %s262 = sshll.u32 [#allocation10], 4
      %s263 = int_to_ptr.vmem [resolvable:$true] %s262
      %265 = dma.vmem_to_hbm [thread:$0]  %s263, 128, %s5, [#allocation4]
    $region41: #{tpu_custom_call.1} parent=1 // pred_fallthru
      _
    // Predicated region
    $region42: #{tpu_custom_call.1} parent=1 // pred_check
      _
    $region43: #{tpu_custom_call.1} parent=1 // pred_check_branch
      %267 = sbr.rel (0) target = $region45
    $region44: #{tpu_custom_call.1} parent=1 // pred_region
      %268 = dma.done [#allocation4], 128
    $region45: #{tpu_custom_call.1} parent=1 // pred_fallthru
      _
    %269 = vsyncpa [#allocation3], 1
    %270 = vsyncpa [#allocation6], 1
    %271 = vsyncpa [#allocation9], 1
    %272 = vsyncpa [#allocation4], 1

</llo_original>
